<compile_context>
chip_gen: v6e
topology: v6e:2x2x1
jax: 0.10.0
libtpu: 0.0.40
codegen_flags: <defaults>
</compile_context>

<pallas_src>
import functools
import math

import jax
import jax.numpy as jnp
from jax.experimental import pallas as pl
from jax.experimental.pallas import tpu as pltpu

LANE = 128      # vreg lane width
SUBLANE = 8     # vreg sublane count (f32)
BF16_SUBLANE = 16


def _round_up(n, m):
    return ((n + m - 1) // m) * m


# ---------------------------------------------------------------------------
# Kernel
# ---------------------------------------------------------------------------
def _mlp_kernel(x_ref, w_ref, b_ref, o_ref, *, n_layers, in_dim):
    """Fused MLP forward over one batch tile.

    x_ref: (TB, in_dim) f32 activations (feature dim NOT padded to 128)
    w_ref: (L, F, F)    bf16 packed, zero-padded weight slab, layer i = (in, out)
    b_ref: (L, 1, F)    f32 packed, zero-padded bias slab
    o_ref: (TB, F)      f32 padded output (wrapper slices to (B, out_dim))
    """
    h = x_ref[...]                                        # f32
    for i in range(n_layers):                             # static unroll (L small)
        # Layer 0: only the first in_dim rows of the padded weight are live.
        w = w_ref[0, :in_dim, :] if i == 0 else w_ref[i]  # bf16
        # bf16 MXU inputs, f32 accumulation; bias-add / ReLU stay in f32.
        h = jnp.dot(h.astype(jnp.bfloat16), w,
                    preferred_element_type=jnp.float32) + b_ref[i]
        if i < n_layers - 1:                              # ReLU on fcs layers only,
            h = jnp.maximum(h, 0.0)                       # not on the output head
    o_ref[...] = h.astype(o_ref.dtype)                    # lane-dense (TB, 128) store


# ---------------------------------------------------------------------------
# Wrapper (jitted: pad + pallas_call + slice fuse into one dispatch)
# ---------------------------------------------------------------------------
@functools.partial(jax.jit, static_argnames=("out_dim", "batch_tile"))
def mlp_forward(x, w_slab, b_slab, *, out_dim, batch_tile=512):
    """x: (B, in_dim) f32; w_slab: (L, F, F) bf16; b_slab: (L, 1, F) f32.

    Returns (B, out_dim) f32.
    """
    B, in_dim = x.shape
    L, F, _ = w_slab.shape

    # Keep the layer-0 weight slice aligned to the bf16 sublane tile (16).
    k0 = _round_up(in_dim, BF16_SUBLANE)
    assert k0 <= F, "input_dim exceeds packed feature width"

    # Pad batch rows to a sublane-aligned tile (features only up to k0).
    Bp = _round_up(max(B, SUBLANE), SUBLANE)
    tb = min(_round_up(batch_tile, SUBLANE), Bp)
    Bp = _round_up(Bp, tb)
    x_p = jnp.pad(x.astype(jnp.float32), ((0, Bp - B), (0, k0 - in_dim)))

    grid = (Bp // tb,)
    flops = 2 * Bp * F * (k0 + (L - 1) * F)
    bytes_accessed = (4 * Bp * (k0 + F)        # f32 activations in + padded out
                      + 2 * w_slab.size        # bf16 weight slab
                      + 4 * b_slab.size)       # f32 bias slab

    out_pad = pl.pallas_call(
        functools.partial(_mlp_kernel, n_layers=L, in_dim=k0),
        out_shape=jax.ShapeDtypeStruct((Bp, F), jnp.float32),
        grid=grid,
        in_specs=[
            pl.BlockSpec((tb, k0), lambda i: (i, 0)),       # activations: batch-tiled
            pl.BlockSpec((L, F, F), lambda i: (0, 0, 0)),   # weight slab: resident
            pl.BlockSpec((L, 1, F), lambda i: (0, 0, 0)),   # bias slab:   resident
        ],
        out_specs=pl.BlockSpec((tb, F), lambda i: (i, 0)),
        compiler_params=pltpu.CompilerParams(
            dimension_semantics=("parallel",)),             # shards batch tiles across TCs
        cost_estimate=pl.CostEstimate(
            flops=flops, transcendentals=0, bytes_accessed=bytes_accessed),
    )(x_p, w_slab, b_slab)

    return out_pad[:B, :out_dim]


# ---------------------------------------------------------------------------
# Parameter construction / packing (done ONCE, outside the per-call path)
# ---------------------------------------------------------------------------
def init_params(key, input_dim, num_nodes, num_layers, output_dim):
    """PyTorch-default-like Linear init: uniform(-1/sqrt(fan_in), 1/sqrt(fan_in)).

    Returns raw (unpadded) f32 weights[(in, out)] and biases[(1, out)].
    """
    dims = [(input_dim, num_nodes)]
    dims += [(num_nodes, num_nodes)] * (num_layers - 1)   # remaining fcs layers
    dims += [(num_nodes, output_dim)]                     # output head

    weights, biases = [], []
    for fan_in, fan_out in dims:
        key, kw, kb = jax.random.split(key, 3)
        bound = 1.0 / math.sqrt(fan_in)
        weights.append(jax.random.uniform(kw, (fan_in, fan_out), jnp.float32, -bound, bound))
        biases.append(jax.random.uniform(kb, (1, fan_out), jnp.float32, -bound, bound))
    return weights, biases


def pack_params(weights, biases, feat_pad=LANE):
    """Pack per-layer (in_i, out_i) weights / (1, out_i) biases into zero-padded
    slabs: weights -> (L, F, F) bf16, biases -> (L, 1, F) f32.  Zero padding is
    numerically inert through bias-add, ReLU and the next matmul."""
    L = len(weights)
    F = feat_pad
    for w in weights:
        assert w.shape[0] <= F and w.shape[1] <= F, "feature dim exceeds pad width"
    w_slab = jnp.zeros((L, F, F), jnp.float32)
    b_slab = jnp.zeros((L, 1, F), jnp.float32)
    for i, (w, b) in enumerate(zip(weights, biases)):
        w_slab = w_slab.at[i, : w.shape[0], : w.shape[1]].set(w)
        b_slab = b_slab.at[i, :, : b.shape[-1]].set(b.reshape(1, -1))
    # bf16 weights: halves the dominant DMA and uses native bf16 MXU passes;
    # accumulation stays f32 inside the kernel (preferred_element_type).
    return w_slab.astype(jnp.bfloat16), b_slab


# ---------------------------------------------------------------------------
# Pure-JAX references (on the raw, unpadded params)
# ---------------------------------------------------------------------------
def reference_forward(x, weights, biases, *, bf16_weights=False):
    h = x.astype(jnp.float32)
    for i, (w, b) in enumerate(zip(weights, biases)):
        if bf16_weights:   # mirrors the kernel's bf16-input / f32-accum matmuls
            h = jnp.dot(h.astype(jnp.bfloat16), w.astype(jnp.bfloat16),
                        preferred_element_type=jnp.float32) + b
        else:
            h = jnp.dot(h, w, preferred_element_type=jnp.float32) + b
        if i < len(weights) - 1:
            h = jnp.maximum(h, 0.0)
    return h


# TODO(synk): the training loop (CrossEntropyLoss/Adam) and the dynamic
# add/remove_neurons/layers architecture surgery are host-side and not part of
# the forward pass; they are intentionally not implemented as kernels.

if __name__ == "__main__":
    # TestModel(input_dims=(32,), output_dims=8, lr=..., num_layers=3, num_nodes=64)
    batch = 8
    input_dim = 32
    num_nodes = 64
    num_layers = 3
    output_dim = 8

    key = jax.random.PRNGKey(0)
    key, kx = jax.random.split(key)
    x = jax.random.normal(kx, (batch, input_dim), jnp.float32)

    weights, biases = init_params(key, input_dim, num_nodes, num_layers, output_dim)
    w_slab, b_slab = pack_params(weights, biases, feat_pad=LANE)

    out = mlp_forward(x, w_slab, b_slab, out_dim=output_dim)
    out = jax.block_until_ready(out)
    assert out.shape == (batch, output_dim)

    # Primary check: reference that mirrors the bf16-weight / f32-accum matmuls.
    ref_bf16 = reference_forward(x, weights, biases, bf16_weights=True)
    assert jnp.allclose(out, ref_bf16, atol=2e-3, rtol=2e-3), \
        "mismatch vs bf16-mirrored JAX reference"

    # Sanity check vs. the pure-f32 reference (loose: bf16 weight rounding).
    ref_f32 = reference_forward(x, weights, biases, bf16_weights=False)
    assert jnp.allclose(out, ref_f32, atol=5e-2, rtol=5e-2), \
        "mismatch vs f32 JAX reference"

    print("KERNEL_OK")
</pallas_src>

<mosaic_0001>
module attributes {stable_mosaic.version = 11 : i64} {
  func.func @_mlp_kernel(%arg0: i32, %arg1: memref<8x32xf32, #tpu.memory_space<vmem>>, %arg2: memref<4x128x128xbf16, #tpu.memory_space<vmem>>, %arg3: memref<4x1x128xf32, #tpu.memory_space<vmem>>, %arg4: memref<8x128xf32, #tpu.memory_space<vmem>>) attributes {dimension_semantics = [#tpu.dimension_semantics<parallel>], iteration_bounds = array<i64: 1>, scalar_prefetch = 0 : i64, scratch_operands = 0 : i64, tpu.core_type = #tpu.core_type<tc>, window_params = [{transform_indices = @transform_0, window_bounds = array<i64: 8, 32>}, {pipeline_mode = #tpu.pipeline_mode<synchronous>, transform_indices = @transform_1, window_bounds = array<i64: 4, 128, 128>}, {pipeline_mode = #tpu.pipeline_mode<synchronous>, transform_indices = @transform_2, window_bounds = array<i64: 4, 1, 128>}, {transform_indices = @transform_3, window_bounds = array<i64: 8, 128>}]} {
    %c0 = arith.constant 0 : index
    %c0_0 = arith.constant 0 : index
    %0 = vector.load %arg1[%c0, %c0_0] : memref<8x32xf32, #tpu.memory_space<vmem>>, vector<8x32xf32>
    %c0_1 = arith.constant 0 : index
    %c0_2 = arith.constant 0 : index
    %c0_3 = arith.constant 0 : index
    %1 = vector.load %arg2[%c0_1, %c0_2, %c0_3] : memref<4x128x128xbf16, #tpu.memory_space<vmem>>, vector<1x32x128xbf16>
    %2 = vector.shape_cast %1 : vector<1x32x128xbf16> to vector<32x128xbf16>
    %3 = arith.truncf %0 : vector<8x32xf32> to vector<8x32xbf16>
    %cst = arith.constant dense<0.000000e+00> : vector<8x128xf32>
    %4 = tpu.matmul %3, %2, %cst {dimension_numbers = #tpu.dot_dimension_numbers<[1], [0], [0], [1], [0, 0, 1, 1], [], []>} : vector<8x32xbf16>, vector<32x128xbf16>, vector<8x128xf32> -> vector<8x128xf32>
    %c0_4 = arith.constant 0 : index
    %c0_5 = arith.constant 0 : index
    %c0_6 = arith.constant 0 : index
    %5 = vector.load %arg3[%c0_4, %c0_5, %c0_6] : memref<4x1x128xf32, #tpu.memory_space<vmem>>, vector<1x1x128xf32>
    %6 = vector.shape_cast %5 : vector<1x1x128xf32> to vector<1x128xf32>
    %7 = vector.broadcast %6 : vector<1x128xf32> to vector<8x128xf32>
    %8 = arith.addf %4, %7 : vector<8x128xf32>
    %cst_7 = arith.constant 0.000000e+00 : f32
    %9 = vector.broadcast %cst_7 : f32 to vector<8x128xf32>
    %10 = arith.maximumf %8, %9 : vector<8x128xf32>
    %c1 = arith.constant 1 : index
    %c0_8 = arith.constant 0 : index
    %c0_9 = arith.constant 0 : index
    %11 = vector.load %arg2[%c1, %c0_8, %c0_9] : memref<4x128x128xbf16, #tpu.memory_space<vmem>>, vector<1x128x128xbf16>
    %12 = vector.shape_cast %11 : vector<1x128x128xbf16> to vector<128x128xbf16>
    %13 = arith.truncf %10 : vector<8x128xf32> to vector<8x128xbf16>
    %cst_10 = arith.constant dense<0.000000e+00> : vector<8x128xf32>
    %14 = tpu.matmul %13, %12, %cst_10 {dimension_numbers = #tpu.dot_dimension_numbers<[1], [0], [0], [1], [0, 0, 1, 1], [], []>} : vector<8x128xbf16>, vector<128x128xbf16>, vector<8x128xf32> -> vector<8x128xf32>
    %c1_11 = arith.constant 1 : index
    %c0_12 = arith.constant 0 : index
    %c0_13 = arith.constant 0 : index
    %15 = vector.load %arg3[%c1_11, %c0_12, %c0_13] : memref<4x1x128xf32, #tpu.memory_space<vmem>>, vector<1x1x128xf32>
    %16 = vector.shape_cast %15 : vector<1x1x128xf32> to vector<1x128xf32>
    %17 = vector.broadcast %16 : vector<1x128xf32> to vector<8x128xf32>
    %18 = arith.addf %14, %17 : vector<8x128xf32>
    %cst_14 = arith.constant 0.000000e+00 : f32
    %19 = vector.broadcast %cst_14 : f32 to vector<8x128xf32>
    %20 = arith.maximumf %18, %19 : vector<8x128xf32>
    %c2 = arith.constant 2 : index
    %c0_15 = arith.constant 0 : index
    %c0_16 = arith.constant 0 : index
    %21 = vector.load %arg2[%c2, %c0_15, %c0_16] : memref<4x128x128xbf16, #tpu.memory_space<vmem>>, vector<1x128x128xbf16>
    %22 = vector.shape_cast %21 : vector<1x128x128xbf16> to vector<128x128xbf16>
    %23 = arith.truncf %20 : vector<8x128xf32> to vector<8x128xbf16>
    %cst_17 = arith.constant dense<0.000000e+00> : vector<8x128xf32>
    %24 = tpu.matmul %23, %22, %cst_17 {dimension_numbers = #tpu.dot_dimension_numbers<[1], [0], [0], [1], [0, 0, 1, 1], [], []>} : vector<8x128xbf16>, vector<128x128xbf16>, vector<8x128xf32> -> vector<8x128xf32>
    %c2_18 = arith.constant 2 : index
    %c0_19 = arith.constant 0 : index
    %c0_20 = arith.constant 0 : index
    %25 = vector.load %arg3[%c2_18, %c0_19, %c0_20] : memref<4x1x128xf32, #tpu.memory_space<vmem>>, vector<1x1x128xf32>
    %26 = vector.shape_cast %25 : vector<1x1x128xf32> to vector<1x128xf32>
    %27 = vector.broadcast %26 : vector<1x128xf32> to vector<8x128xf32>
    %28 = arith.addf %24, %27 : vector<8x128xf32>
    %cst_21 = arith.constant 0.000000e+00 : f32
    %29 = vector.broadcast %cst_21 : f32 to vector<8x128xf32>
    %30 = arith.maximumf %28, %29 : vector<8x128xf32>
    %c3 = arith.constant 3 : index
    %c0_22 = arith.constant 0 : index
    %c0_23 = arith.constant 0 : index
    %31 = vector.load %arg2[%c3, %c0_22, %c0_23] : memref<4x128x128xbf16, #tpu.memory_space<vmem>>, vector<1x128x128xbf16>
    %32 = vector.shape_cast %31 : vector<1x128x128xbf16> to vector<128x128xbf16>
    %33 = arith.truncf %30 : vector<8x128xf32> to vector<8x128xbf16>
    %cst_24 = arith.constant dense<0.000000e+00> : vector<8x128xf32>
    %34 = tpu.matmul %33, %32, %cst_24 {dimension_numbers = #tpu.dot_dimension_numbers<[1], [0], [0], [1], [0, 0, 1, 1], [], []>} : vector<8x128xbf16>, vector<128x128xbf16>, vector<8x128xf32> -> vector<8x128xf32>
    %c3_25 = arith.constant 3 : index
    %c0_26 = arith.constant 0 : index
    %c0_27 = arith.constant 0 : index
    %35 = vector.load %arg3[%c3_25, %c0_26, %c0_27] : memref<4x1x128xf32, #tpu.memory_space<vmem>>, vector<1x1x128xf32>
    %36 = vector.shape_cast %35 : vector<1x1x128xf32> to vector<1x128xf32>
    %37 = vector.broadcast %36 : vector<1x128xf32> to vector<8x128xf32>
    %38 = arith.addf %34, %37 : vector<8x128xf32>
    %c0_28 = arith.constant 0 : index
    %c0_29 = arith.constant 0 : index
    %39 = vector.load %arg4[%c0_28, %c0_29] : memref<8x128xf32, #tpu.memory_space<vmem>>, vector<8x128xf32>
    tpu.vector_store %arg4[%c0_28, %c0_29], %38 {strides = array<i32>} : memref<8x128xf32, #tpu.memory_space<vmem>>, vector<8x128xf32>,
    return
  }
  func.func @transform_0(%arg0: i32) -> (i32, i32) {
    %c0_i32 = arith.constant 0 : i32
    %c0_i32_0 = arith.constant 0 : i32
    return %arg0, %c0_i32 : i32, i32
  }
  func.func @transform_1(%arg0: i32) -> (i32, i32, i32) {
    %c0_i32 = arith.constant 0 : i32
    %c0_i32_0 = arith.constant 0 : i32
    %c0_i32_1 = arith.constant 0 : i32
    %c0_i32_2 = arith.constant 0 : i32
    return %c0_i32, %c0_i32_0, %c0_i32_1 : i32, i32, i32
  }
  func.func @transform_2(%arg0: i32) -> (i32, i32, i32) {
    %c0_i32 = arith.constant 0 : i32
    %c0_i32_0 = arith.constant 0 : i32
    %c0_i32_1 = arith.constant 0 : i32
    %c0_i32_2 = arith.constant 0 : i32
    return %c0_i32, %c0_i32_0, %c0_i32_1 : i32, i32, i32
  }
  func.func @transform_3(%arg0: i32) -> (i32, i32) {
    %c0_i32 = arith.constant 0 : i32
    %c0_i32_0 = arith.constant 0 : i32
    return %arg0, %c0_i32 : i32, i32
  }
}

</mosaic_0001>

<llo_original>
// kernel: mlp_forward.1
$region0: #{mlp_forward.1}
  #allocation0 [shape = 'u32[]', space=smem, size = 0x4, offset = 0x4, fixed_abs, tag = 'smem constant byte address 0x4 - core index']
  #allocation1 [shape = 'u32[144,128]{1,0:T(1,128)}', space=vmem, size = 0x12000, scoped, tag = 'internal scratch']
  %s0 = inlined_call_operand.hbm [shape: f32[8,32], index: 0, kind: input, shape index: {}]
  %s1 = inlined_call_operand.hbm [shape: bf16[4,128,128], index: 1, kind: input, shape index: {}]
  %s2 = inlined_call_operand.hbm [shape: f32[4,1,128], index: 2, kind: input, shape index: {}]
  %s3 = inlined_call_operand.hbm [shape: f32[8,128], index: 3, kind: output, shape index: {}]
  %s4 = sld [smem:[#allocation0]]
  $region34: #{mlp_forward.1} parent=0
    _
  %s6 = ssub.s32 1, %s4
  %s7 = scalar_select 0, %s6, %s4
  $region1: #{mlp_forward.1} parent=0
    #allocation2 [shape = 'u8[4096]{0}', space=vmem, size = 0x1000, scoped, tag = 'input window, operand 0, single buffered']
    #allocation3 [shape = 's32[1]{0}', space=sflag, size = 0x4, scoped, tag = 'scoped memory for mlp_forward.1']
    #allocation4 [shape = 's32[1]{0}', space=sflag, size = 0x4, scoped, tag = 'scoped memory for mlp_forward.1']
    #allocation5 [shape = 'u8[131072]{0}', space=vmem, size = 0x20000, scoped, tag = 'input window, operand 1, single buffered']
    #allocation6 [shape = 's32[1]{0}', space=sflag, size = 0x4, scoped, tag = 'scoped memory for mlp_forward.1']
    #allocation7 [shape = 'u8[2048]{0}', space=vmem, size = 0x800, scoped, tag = 'input window, operand 2, single buffered']
    #allocation8 [shape = 'u8[4096]{0}', space=vmem, size = 0x1000, scoped, tag = 'output window, operand 0, single buffered']
    %8 = vsyncpa [#allocation3], 0
    %9 = vsyncpa [#allocation6], 0
    %10 = vsyncpa [#allocation4], 0
    // Predicated region
    $region2: #{mlp_forward.1} parent=1 // pred_check
      _
    $region3: #{mlp_forward.1} parent=1 // pred_check_branch
      %12 = sbr.rel (0) target = $region5
    $region4: #{mlp_forward.1} parent=1 // pred_region
      %s14 = ssub.s32 128, 128
      %15 = vsyncadd [#allocation3], %s14
      %s17 = sshll.u32 [#allocation2], 4
      %s18 = int_to_ptr.vmem [resolvable:$true] %s17
      %20 = dma.hbm_to_vmem [thread:$0]  %s0, 128, %s18, [#allocation3]
    $region5: #{mlp_forward.1} parent=1 // pred_fallthru
      _
    // Predicated region
    $region6: #{mlp_forward.1} parent=1 // pred_check
      _
    $region7: #{mlp_forward.1} parent=1 // pred_check_branch
      %22 = sbr.rel (0) target = $region9
    $region8: #{mlp_forward.1} parent=1 // pred_region
      %s24 = ssub.s32 4096, 4096
      %25 = vsyncadd [#allocation6], %s24
      %s26 = sshll.u32 [#allocation5], 4
      %s27 = int_to_ptr.vmem [resolvable:$true] %s26
      %32 = dma.hbm_to_vmem [thread:$0]  %s1, 4096, %s27, [#allocation6], 64, 64, 4
    $region9: #{mlp_forward.1} parent=1 // pred_fallthru
      _
    // Predicated region
    $region10: #{mlp_forward.1} parent=1 // pred_check
      _
    $region11: #{mlp_forward.1} parent=1 // pred_check_branch
      %34 = sbr.rel (0) target = $region13
    $region12: #{mlp_forward.1} parent=1 // pred_region
      %s36 = ssub.s32 64, 64
      %37 = vsyncadd [#allocation6], %s36
      %s38 = sshll.u32 [#allocation7], 4
      %s39 = int_to_ptr.vmem [resolvable:$true] %s38
      %44 = dma.hbm_to_vmem [thread:$0]  %s2, 64, %s39, [#allocation6], 16, 16, 1
    $region13: #{mlp_forward.1} parent=1 // pred_fallthru
      _
    // Predicated region
    $region14: #{mlp_forward.1} parent=1 // pred_check
      _
    $region15: #{mlp_forward.1} parent=1 // pred_check_branch
      %46 = sbr.rel (0) target = $region17
    $region16: #{mlp_forward.1} parent=1 // pred_region
      %47 = dma.done [#allocation3], 128
    $region17: #{mlp_forward.1} parent=1 // pred_fallthru
      _
    // Predicated region
    $region18: #{mlp_forward.1} parent=1 // pred_check
      _
    $region19: #{mlp_forward.1} parent=1 // pred_check_branch
      %49 = sbr.rel (0) target = $region21
    $region20: #{mlp_forward.1} parent=1 // pred_region
      %50 = dma.done [#allocation6], 4096
    $region21: #{mlp_forward.1} parent=1 // pred_fallthru
      _
    // Predicated region
    $region22: #{mlp_forward.1} parent=1 // pred_check
      _
    $region23: #{mlp_forward.1} parent=1 // pred_check_branch
      %52 = sbr.rel (0) target = $region25
    $region24: #{mlp_forward.1} parent=1 // pred_region
      %53 = dma.done [#allocation6], 64
    $region25: #{mlp_forward.1} parent=1 // pred_fallthru
      _
    %v55 = vld [vmem:[#allocation2] sm:$0xff]
    %v56 = vld [vmem:[#allocation5] sm:$0xf]
    %v57 = vld [vmem:[#allocation5 + $0x4] sm:$0xf]
    %v58 = vld [vmem:[#allocation5 + $0x8] sm:$0xf]
    %v59 = vld [vmem:[#allocation5 + $0xc] sm:$0xf]
    %v60 = vpack.c.bf16 %v55, %v55
    %v61 = vld [vmem:[#allocation7] sm:$0x1]
    %v63 = vlaneseq
    %v64 = vshrl.u32 %v63, 7
    %v65 = vsub.s32 0, %v64
    %v66 = vrot.slane %v61, %v65
    %v72 = vunpack.c.l.b16 %v56
    %v73 = vunpack.c.l.b16 %v57
    %v74 = vunpack.c.l.b16 %v58
    %v75 = vunpack.c.l.b16 %v59
    %v76 = vpack.c.b16 %v73, %v72
    %v77 = vpack.c.b16 %v75, %v74
    %vm80 = vcmask 261120
    %v82 = vsel %vm80, %v60, 0
    %84 = vmatprep.subr.bf16.mxu0 0
    %85 = vmatpush1.bf16.msra.mxu0 0
    %86 = vmatprep.subr.bf16.mxu0 0
    %87 = vmatpush1.bf16.msra.mxu0 0
    %88 = vmatprep.subr.bf16.mxu0 0
    %89 = vmatpush1.bf16.msra.mxu0 0
    %90 = vmatprep.subr.bf16.mxu0 0
    %91 = vmatpush1.bf16.msra.mxu0 0
    %92 = vmatprep.subr.bf16.mxu0 0
    %93 = vmatpush1.bf16.msra.mxu0 0
    %94 = vmatprep.subr.bf16.mxu0 0
    %95 = vmatpush1.bf16.msra.mxu0 0
    %96 = vmatprep.subr.bf16.mxu0 0
    %97 = vmatpush1.bf16.msra.mxu0 %v77
    %98 = vmatprep.subr.bf16.mxu0 0
    %99 = vmatpush1.bf16.msra.mxu0 %v76
    %100 = vmatprep.subr.bf16.mxu0 0
    %101 = vmatpush2.bf16.msra.mxu0 0
    %102 = vmatprep.subr.bf16.mxu0 0
    %103 = vmatpush2.bf16.msra.mxu0 0
    %104 = vmatprep.subr.bf16.mxu0 0
    %105 = vmatpush2.bf16.msra.mxu0 0
    %106 = vmatprep.subr.bf16.mxu0 0
    %107 = vmatpush2.bf16.msra.mxu0 0
    %108 = vmatprep.subr.bf16.mxu0 0
    %109 = vmatpush2.bf16.msra.mxu0 0
    %110 = vmatprep.subr.bf16.mxu0 0
    %111 = vmatpush2.bf16.msra.mxu0 0
    %112 = vmatprep.subr.bf16.mxu0 0
    %113 = vmatpush2.bf16.msra.mxu0 0
    %114 = vmatprep.subr.bf16.mxu0 0
    %115 = vmatpush2.bf16.msra.mxu0 0
    %116 = vmatprep.mubr.bf16.mxu0 0
    %117 = vmatmul.mubr.bf16.gmra.mxu0 %v82
    %v118 = vpop.f32.mrf.mxu0
    %v119 = vadd.f32 %v66, %v118
    %v120 = vpop.f32.mrf.mxu0
    %v121 = vpop.f32.mrf.mxu0
    %v122 = vpop.f32.mrf.mxu0
    %123 = vdwg.mxu0
    %v124 = vmax.f32 %v119, 0.0
    %s125 = scalar_lea.vmem [#allocation5], 64
    %v126 = vld [vmem:[%s125] sm:$0xf]
    %v127 = vld [vmem:[%s125 + $0x4] sm:$0xf]
    %v128 = vld [vmem:[%s125 + $0x8] sm:$0xf]
    %v129 = vld [vmem:[%s125 + $0xc] sm:$0xf]
    %v130 = vld [vmem:[%s125 + $0x10] sm:$0xf]
    %v131 = vld [vmem:[%s125 + $0x14] sm:$0xf]
    %v132 = vld [vmem:[%s125 + $0x18] sm:$0xf]
    %v133 = vld [vmem:[%s125 + $0x1c] sm:$0xf]
    %v134 = vld [vmem:[%s125 + $0x20] sm:$0xf]
    %v135 = vld [vmem:[%s125 + $0x24] sm:$0xf]
    %v136 = vld [vmem:[%s125 + $0x28] sm:$0xf]
    %v137 = vld [vmem:[%s125 + $0x2c] sm:$0xf]
    %v138 = vld [vmem:[%s125 + $0x30] sm:$0xf]
    %v139 = vld [vmem:[%s125 + $0x34] sm:$0xf]
    %v140 = vld [vmem:[%s125 + $0x38] sm:$0xf]
    %v141 = vld [vmem:[%s125 + $0x3c] sm:$0xf]
    %v142 = vpack.c.bf16 %v124, %v124
    %s143 = scalar_lea.vmem [#allocation7], 1
    %v144 = vld [vmem:[%s143] sm:$0x1]
    %v146 = vlaneseq
    %v147 = vshrl.u32 %v146, 7
    %v148 = vsub.s32 0, %v147
    %v149 = vrot.slane %v144, %v148
    %v167 = vunpack.c.l.b16 %v126
    %v168 = vunpack.c.l.b16 %v127
    %v169 = vunpack.c.l.b16 %v128
    %v170 = vunpack.c.l.b16 %v129
    %v171 = vunpack.c.l.b16 %v130
    %v172 = vunpack.c.l.b16 %v131
    %v173 = vunpack.c.l.b16 %v132
    %v174 = vunpack.c.l.b16 %v133
    %v175 = vunpack.c.l.b16 %v134
    %v176 = vunpack.c.l.b16 %v135
    %v177 = vunpack.c.l.b16 %v136
    %v178 = vunpack.c.l.b16 %v137
    %v179 = vunpack.c.l.b16 %v138
    %v180 = vunpack.c.l.b16 %v139
    %v181 = vunpack.c.l.b16 %v140
    %v182 = vunpack.c.l.b16 %v141
    %v183 = vpack.c.b16 %v168, %v167
    %v184 = vpack.c.b16 %v170, %v169
    %v185 = vpack.c.b16 %v172, %v171
    %v186 = vpack.c.b16 %v174, %v173
    %v187 = vpack.c.b16 %v176, %v175
    %v188 = vpack.c.b16 %v178, %v177
    %v189 = vpack.c.b16 %v180, %v179
    %v190 = vpack.c.b16 %v182, %v181
    %199 = vmatprep.subr.bf16.mxu0 0
    %200 = vmatpush1.bf16.msra.mxu0 %v190
    %201 = vmatprep.subr.bf16.mxu0 0
    %202 = vmatpush1.bf16.msra.mxu0 %v189
    %203 = vmatprep.subr.bf16.mxu0 0
    %204 = vmatpush1.bf16.msra.mxu0 %v188
    %205 = vmatprep.subr.bf16.mxu0 0
    %206 = vmatpush1.bf16.msra.mxu0 %v187
    %207 = vmatprep.subr.bf16.mxu0 0
    %208 = vmatpush1.bf16.msra.mxu0 %v186
    %209 = vmatprep.subr.bf16.mxu0 0
    %210 = vmatpush1.bf16.msra.mxu0 %v185
    %211 = vmatprep.subr.bf16.mxu0 0
    %212 = vmatpush1.bf16.msra.mxu0 %v184
    %213 = vmatprep.subr.bf16.mxu0 0
    %214 = vmatpush1.bf16.msra.mxu0 %v183
    %215 = vmatprep.subr.bf16.mxu0 0
    %216 = vmatpush2.bf16.msra.mxu0 0
    %217 = vmatprep.subr.bf16.mxu0 0
    %218 = vmatpush2.bf16.msra.mxu0 0
    %219 = vmatprep.subr.bf16.mxu0 0
    %220 = vmatpush2.bf16.msra.mxu0 0
    %221 = vmatprep.subr.bf16.mxu0 0
    %222 = vmatpush2.bf16.msra.mxu0 0
    %223 = vmatprep.subr.bf16.mxu0 0
    %224 = vmatpush2.bf16.msra.mxu0 0
    %225 = vmatprep.subr.bf16.mxu0 0
    %226 = vmatpush2.bf16.msra.mxu0 0
    %227 = vmatprep.subr.bf16.mxu0 0
    %228 = vmatpush2.bf16.msra.mxu0 0
    %229 = vmatprep.subr.bf16.mxu0 0
    %230 = vmatpush2.bf16.msra.mxu0 0
    %231 = vmatprep.mubr.bf16.mxu0 0
    %232 = vmatmul.mubr.bf16.gmra.mxu0 %v142
    %v233 = vpop.f32.mrf.mxu0
    %v234 = vadd.f32 %v149, %v233
    %v235 = vpop.f32.mrf.mxu0
    %v236 = vpop.f32.mrf.mxu0
    %v237 = vpop.f32.mrf.mxu0
    %238 = vdwg.mxu0
    %v239 = vmax.f32 %v234, 0.0
    %s240 = scalar_lea.vmem [#allocation5], 128
    %v241 = vld [vmem:[%s240] sm:$0xf]
    %v242 = vld [vmem:[%s240 + $0x4] sm:$0xf]
    %v243 = vld [vmem:[%s240 + $0x8] sm:$0xf]
    %v244 = vld [vmem:[%s240 + $0xc] sm:$0xf]
    %v245 = vld [vmem:[%s240 + $0x10] sm:$0xf]
    %v246 = vld [vmem:[%s240 + $0x14] sm:$0xf]
    %v247 = vld [vmem:[%s240 + $0x18] sm:$0xf]
    %v248 = vld [vmem:[%s240 + $0x1c] sm:$0xf]
    %v249 = vld [vmem:[%s240 + $0x20] sm:$0xf]
    %v250 = vld [vmem:[%s240 + $0x24] sm:$0xf]
    %v251 = vld [vmem:[%s240 + $0x28] sm:$0xf]
    %v252 = vld [vmem:[%s240 + $0x2c] sm:$0xf]
    %v253 = vld [vmem:[%s240 + $0x30] sm:$0xf]
    %v254 = vld [vmem:[%s240 + $0x34] sm:$0xf]
    %v255 = vld [vmem:[%s240 + $0x38] sm:$0xf]
    %v256 = vld [vmem:[%s240 + $0x3c] sm:$0xf]
    %v257 = vpack.c.bf16 %v239, %v239
    %s258 = scalar_lea.vmem [#allocation7], 2
    %v259 = vld [vmem:[%s258] sm:$0x1]
    %v261 = vlaneseq
    %v262 = vshrl.u32 %v261, 7
    %v263 = vsub.s32 0, %v262
    %v264 = vrot.slane %v259, %v263
    %v282 = vunpack.c.l.b16 %v241
    %v283 = vunpack.c.l.b16 %v242
    %v284 = vunpack.c.l.b16 %v243
    %v285 = vunpack.c.l.b16 %v244
    %v286 = vunpack.c.l.b16 %v245
    %v287 = vunpack.c.l.b16 %v246
    %v288 = vunpack.c.l.b16 %v247
    %v289 = vunpack.c.l.b16 %v248
    %v290 = vunpack.c.l.b16 %v249
    %v291 = vunpack.c.l.b16 %v250
    %v292 = vunpack.c.l.b16 %v251
    %v293 = vunpack.c.l.b16 %v252
    %v294 = vunpack.c.l.b16 %v253
    %v295 = vunpack.c.l.b16 %v254
    %v296 = vunpack.c.l.b16 %v255
    %v297 = vunpack.c.l.b16 %v256
    %v298 = vpack.c.b16 %v283, %v282
    %v299 = vpack.c.b16 %v285, %v284
    %v300 = vpack.c.b16 %v287, %v286
    %v301 = vpack.c.b16 %v289, %v288
    %v302 = vpack.c.b16 %v291, %v290
    %v303 = vpack.c.b16 %v293, %v292
    %v304 = vpack.c.b16 %v295, %v294
    %v305 = vpack.c.b16 %v297, %v296
    %314 = vmatprep.subr.bf16.mxu0 0
    %315 = vmatpush1.bf16.msra.mxu0 %v305
    %316 = vmatprep.subr.bf16.mxu0 0
    %317 = vmatpush1.bf16.msra.mxu0 %v304
    %318 = vmatprep.subr.bf16.mxu0 0
    %319 = vmatpush1.bf16.msra.mxu0 %v303
    %320 = vmatprep.subr.bf16.mxu0 0
    %321 = vmatpush1.bf16.msra.mxu0 %v302
    %322 = vmatprep.subr.bf16.mxu0 0
    %323 = vmatpush1.bf16.msra.mxu0 %v301
    %324 = vmatprep.subr.bf16.mxu0 0
    %325 = vmatpush1.bf16.msra.mxu0 %v300
    %326 = vmatprep.subr.bf16.mxu0 0
    %327 = vmatpush1.bf16.msra.mxu0 %v299
    %328 = vmatprep.subr.bf16.mxu0 0
    %329 = vmatpush1.bf16.msra.mxu0 %v298
    %330 = vmatprep.subr.bf16.mxu0 0
    %331 = vmatpush2.bf16.msra.mxu0 0
    %332 = vmatprep.subr.bf16.mxu0 0
    %333 = vmatpush2.bf16.msra.mxu0 0
    %334 = vmatprep.subr.bf16.mxu0 0
    %335 = vmatpush2.bf16.msra.mxu0 0
    %336 = vmatprep.subr.bf16.mxu0 0
    %337 = vmatpush2.bf16.msra.mxu0 0
    %338 = vmatprep.subr.bf16.mxu0 0
    %339 = vmatpush2.bf16.msra.mxu0 0
    %340 = vmatprep.subr.bf16.mxu0 0
    %341 = vmatpush2.bf16.msra.mxu0 0
    %342 = vmatprep.subr.bf16.mxu0 0
    %343 = vmatpush2.bf16.msra.mxu0 0
    %344 = vmatprep.subr.bf16.mxu0 0
    %345 = vmatpush2.bf16.msra.mxu0 0
    %346 = vmatprep.mubr.bf16.mxu0 0
    %347 = vmatmul.mubr.bf16.gmra.mxu0 %v257
    %v348 = vpop.f32.mrf.mxu0
    %v349 = vadd.f32 %v264, %v348
    %v350 = vpop.f32.mrf.mxu0
    %v351 = vpop.f32.mrf.mxu0
    %v352 = vpop.f32.mrf.mxu0
    %353 = vdwg.mxu0
    %v354 = vmax.f32 %v349, 0.0
    %s355 = scalar_lea.vmem [#allocation5], 192
    %v356 = vld [vmem:[%s355] sm:$0xf]
    %v357 = vld [vmem:[%s355 + $0x4] sm:$0xf]
    %v358 = vld [vmem:[%s355 + $0x8] sm:$0xf]
    %v359 = vld [vmem:[%s355 + $0xc] sm:$0xf]
    %v360 = vld [vmem:[%s355 + $0x10] sm:$0xf]
    %v361 = vld [vmem:[%s355 + $0x14] sm:$0xf]
    %v362 = vld [vmem:[%s355 + $0x18] sm:$0xf]
    %v363 = vld [vmem:[%s355 + $0x1c] sm:$0xf]
    %v364 = vld [vmem:[%s355 + $0x20] sm:$0xf]
    %v365 = vld [vmem:[%s355 + $0x24] sm:$0xf]
    %v366 = vld [vmem:[%s355 + $0x28] sm:$0xf]
    %v367 = vld [vmem:[%s355 + $0x2c] sm:$0xf]
    %v368 = vld [vmem:[%s355 + $0x30] sm:$0xf]
    %v369 = vld [vmem:[%s355 + $0x34] sm:$0xf]
    %v370 = vld [vmem:[%s355 + $0x38] sm:$0xf]
    %v371 = vld [vmem:[%s355 + $0x3c] sm:$0xf]
    %v372 = vpack.c.bf16 %v354, %v354
    %s373 = scalar_lea.vmem [#allocation7], 3
    %v374 = vld [vmem:[%s373] sm:$0x1]
    %v376 = vlaneseq
    %v377 = vshrl.u32 %v376, 7
    %v378 = vsub.s32 0, %v377
    %v379 = vrot.slane %v374, %v378
    %v397 = vunpack.c.l.b16 %v356
    %v398 = vunpack.c.l.b16 %v357
    %v399 = vunpack.c.l.b16 %v358
    %v400 = vunpack.c.l.b16 %v359
    %v401 = vunpack.c.l.b16 %v360
    %v402 = vunpack.c.l.b16 %v361
    %v403 = vunpack.c.l.b16 %v362
    %v404 = vunpack.c.l.b16 %v363
    %v405 = vunpack.c.l.b16 %v364
    %v406 = vunpack.c.l.b16 %v365
    %v407 = vunpack.c.l.b16 %v366
    %v408 = vunpack.c.l.b16 %v367
    %v409 = vunpack.c.l.b16 %v368
    %v410 = vunpack.c.l.b16 %v369
    %v411 = vunpack.c.l.b16 %v370
    %v412 = vunpack.c.l.b16 %v371
    %v413 = vpack.c.b16 %v398, %v397
    %v414 = vpack.c.b16 %v400, %v399
    %v415 = vpack.c.b16 %v402, %v401
    %v416 = vpack.c.b16 %v404, %v403
    %v417 = vpack.c.b16 %v406, %v405
    %v418 = vpack.c.b16 %v408, %v407
    %v419 = vpack.c.b16 %v410, %v409
    %v420 = vpack.c.b16 %v412, %v411
    %429 = vmatprep.subr.bf16.mxu0 0
    %430 = vmatpush1.bf16.msra.mxu0 %v420
    %431 = vmatprep.subr.bf16.mxu0 0
    %432 = vmatpush1.bf16.msra.mxu0 %v419
    %433 = vmatprep.subr.bf16.mxu0 0
    %434 = vmatpush1.bf16.msra.mxu0 %v418
    %435 = vmatprep.subr.bf16.mxu0 0
    %436 = vmatpush1.bf16.msra.mxu0 %v417
    %437 = vmatprep.subr.bf16.mxu0 0
    %438 = vmatpush1.bf16.msra.mxu0 %v416
    %439 = vmatprep.subr.bf16.mxu0 0
    %440 = vmatpush1.bf16.msra.mxu0 %v415
    %441 = vmatprep.subr.bf16.mxu0 0
    %442 = vmatpush1.bf16.msra.mxu0 %v414
    %443 = vmatprep.subr.bf16.mxu0 0
    %444 = vmatpush1.bf16.msra.mxu0 %v413
    %445 = vmatprep.subr.bf16.mxu0 0
    %446 = vmatpush2.bf16.msra.mxu0 0
    %447 = vmatprep.subr.bf16.mxu0 0
    %448 = vmatpush2.bf16.msra.mxu0 0
    %449 = vmatprep.subr.bf16.mxu0 0
    %450 = vmatpush2.bf16.msra.mxu0 0
    %451 = vmatprep.subr.bf16.mxu0 0
    %452 = vmatpush2.bf16.msra.mxu0 0
    %453 = vmatprep.subr.bf16.mxu0 0
    %454 = vmatpush2.bf16.msra.mxu0 0
    %455 = vmatprep.subr.bf16.mxu0 0
    %456 = vmatpush2.bf16.msra.mxu0 0
    %457 = vmatprep.subr.bf16.mxu0 0
    %458 = vmatpush2.bf16.msra.mxu0 0
    %459 = vmatprep.subr.bf16.mxu0 0
    %460 = vmatpush2.bf16.msra.mxu0 0
    %461 = vmatprep.mubr.bf16.mxu0 0
    %462 = vmatmul.mubr.bf16.gmra.mxu0 %v372
    %v463 = vpop.f32.mrf.mxu0
    %v464 = vadd.f32 %v379, %v463
    %v465 = vpop.f32.mrf.mxu0
    %v466 = vpop.f32.mrf.mxu0
    %v467 = vpop.f32.mrf.mxu0
    %468 = vdwg.mxu0
    %469 = vst [vmem:[#allocation8] sm:$0xff] %v464
    // Predicated region
    $region26: #{mlp_forward.1} parent=1 // pred_check
      _
    $region27: #{mlp_forward.1} parent=1 // pred_check_branch
      %471 = sbr.rel (0) target = $region29
    $region28: #{mlp_forward.1} parent=1 // pred_region
      %s473 = ssub.s32 128, 128
      %474 = vsyncadd [#allocation4], %s473
      %s476 = sshll.u32 [#allocation8], 4
      %s477 = int_to_ptr.vmem [resolvable:$true] %s476
      %479 = dma.vmem_to_hbm [thread:$0]  %s477, 128, %s3, [#allocation4]
    $region29: #{mlp_forward.1} parent=1 // pred_fallthru
      _
    // Predicated region
    $region30: #{mlp_forward.1} parent=1 // pred_check
      _
    $region31: #{mlp_forward.1} parent=1 // pred_check_branch
      %481 = sbr.rel (0) target = $region33
    $region32: #{mlp_forward.1} parent=1 // pred_region
      %482 = dma.done [#allocation4], 128
    $region33: #{mlp_forward.1} parent=1 // pred_fallthru
      _
    %483 = vsyncpa [#allocation3], 1
    %484 = vsyncpa [#allocation6], 1
    %485 = vsyncpa [#allocation4], 1

</llo_original>
